<compile_context>
chip_gen: v5e
topology: v5e:2x2
jax: 0.10.0
libtpu: 0.0.40
codegen_flags: <defaults>
</compile_context>

<pallas_src>
import functools

import jax
import jax.numpy as jnp
from jax.experimental import pallas as pl
from jax.experimental.pallas import tpu as pltpu

_SQRT1_2 = 0.7071067811865476
_HALO = 128  # halo is served from one 128-lane block => requires pad <= 128


def _vmem_limit_bytes():
    try:
        cap = getattr(pltpu.get_tpu_info(), "vmem_capacity_bytes", None)
        if cap:
            return int(cap) * 4 // 5          # ~100 MiB on v5e/v6e, ~51 MiB on v7x
    except Exception:
        pass
    return 48 * 1024 * 1024                   # safe everywhere, > default scoped limit


def _lane_mask(t, tile, t_valid):
    """(1, tile) f32 mask of columns that belong to the real (un-padded) T."""
    col = jax.lax.broadcasted_iota(jnp.int32, (1, tile), 1) + t * tile
    return (col < t_valid).astype(jnp.float32)


def _stats_tile(v):
    """Pack sum / sum-of-squares of an (already masked) f32 tile into lanes
    0 / 1 of a (1, 1, 1, 128) partial-stats block (reduced in the wrapper)."""
    s1 = jnp.sum(v)
    s2 = jnp.sum(v * v)
    lane = jax.lax.broadcasted_iota(jnp.int32, (1, 1, 1, 128), 3)
    return jnp.where(lane == 0, s1, 0.0) + jnp.where(lane == 1, s2, 0.0)


# ----------------------------- pass 1 -----------------------------
def _conv1_kernel(xl_ref, x_ref, xr_ref, w1_ref, b1_ref, h_ref, st_ref,
                  xp_ref, *, dil, ksize, t_valid):
    """Dilated Conv1d(C -> H, ksize, 'same') on one (batch, T-tile); emits the
    pre-norm h tile plus GroupNorm(1, H) sum/sumsq partials."""
    t = pl.program_id(1)
    nt = pl.num_programs(1)
    C = x_ref.shape[1]
    tile = x_ref.shape[2]
    half = ksize // 2
    pad = half * dil
    cdt = xp_ref.dtype

    # Centre of the halo'd scratch: 128-aligned, unmasked full-tile store.
    xp_ref[:, pl.ds(_HALO, tile)] = x_ref[0].astype(cdt)
    # Halos from the neighbouring 128-col blocks; zeroed at sequence edges.
    # Only these 2*pad columns are touched (no full-scratch zeroing).
    zero = jnp.zeros((C, pad), cdt)
    left = xl_ref[0].astype(cdt)[:, _HALO - pad:]
    xp_ref[:, pl.ds(_HALO - pad, pad)] = jnp.where(t == 0, zero, left)
    right = xr_ref[0].astype(cdt)[:, :pad]
    xp_ref[:, pl.ds(_HALO + tile, pad)] = jnp.where(t == nt - 1, zero, right)

    # ksize accumulated dots (no (ksize*C, tile) concatenate temporary).
    acc = jnp.zeros((w1_ref.shape[1], tile), jnp.float32)
    for k in range(ksize):
        tap = xp_ref[:, pl.ds(_HALO + (k - half) * dil, tile)]
        acc = acc + jnp.dot(w1_ref[k], tap, preferred_element_type=jnp.float32)
    h = acc + b1_ref[...]

    h_ref[0] = h.astype(h_ref.dtype)
    st_ref[...] = _stats_tile(h * _lane_mask(t, tile, t_valid))


# ----------------------------- pass 2 -----------------------------
def _mid_kernel(h_ref, g1p_ref, be1p_ref, w2_ref, b2_ref, a_ref, st_ref,
                *, t_valid):
    """Apply the (per-batch pre-folded) GroupNorm(1,H) affine, exact GELU and
    the 1x1 conv; store the activation and emit GroupNorm(1,2C) partials."""
    t = pl.program_id(1)
    tile = h_ref.shape[2]
    h = h_ref[0].astype(jnp.float32)
    hn = h * g1p_ref[0] + be1p_ref[0]
    a = 0.5 * hn * (1.0 + jax.lax.erf(hn * _SQRT1_2))   # nn.GELU (erf form)
    a_ref[0] = a.astype(a_ref.dtype)
    y = jnp.dot(w2_ref[...], a.astype(w2_ref.dtype),
                preferred_element_type=jnp.float32) + b2_ref[...]
    st_ref[...] = _stats_tile(y * _lane_mask(t, tile, t_valid))


# ----------------------------- pass 3 -----------------------------
def _apply_kernel(a_ref, x_ref, w2_ref, sc2_ref, sh2_ref, ls_ref, o_ref,
                  *, t_valid):
    """Recompute the cheap 1x1 conv, apply the folded GroupNorm(1,2C) affine
    (which also carries the conv bias), GLU, LayerScale and the residual.
    Columns >= T are forced to zero so the padded tail stays exactly zero."""
    t = pl.program_id(1)
    C = x_ref.shape[1]
    tile = x_ref.shape[2]
    y = jnp.dot(w2_ref[...], a_ref[0], preferred_element_type=jnp.float32)
    y = y * sc2_ref[0] + sh2_ref[0]
    glu = y[:C] * jax.nn.sigmoid(y[C:])
    out = x_ref[0].astype(jnp.float32) + ls_ref[...] * glu
    o_ref[0] = (out * _lane_mask(t, tile, t_valid)).astype(o_ref.dtype)


# ----------------------------- wrapper -----------------------------
def _layer_forward(x_pad, p, *, dil, ksize, t_valid, tile, cdt, cparams):
    B, C, Tp = x_pad.shape
    NT = Tp // tile
    H = p["w1"].shape[0]
    r = tile // 128
    nblk = Tp // 128
    f32 = jnp.float32

    w1 = jnp.transpose(p["w1"], (2, 0, 1)).astype(cdt)        # (ksize, H, C)
    b1 = p["b1"].reshape(H, 1).astype(f32)
    w2 = p["w2"].astype(cdt)                                   # (2C, H)
    b2 = p["b2"].reshape(2 * C, 1).astype(f32)
    g1 = p["g1"].astype(f32)
    be1 = p["be1"].astype(f32)
    g2 = p["g2"].astype(f32)
    be2 = p["be2"].astype(f32)
    ls = p["sc"].reshape(C, 1).astype(f32)

    tile_x = pl.BlockSpec((1, C, tile), lambda b, t: (b, 0, t))
    tile_h = pl.BlockSpec((1, H, tile), lambda b, t: (b, 0, t))
    halo_l = pl.BlockSpec((1, C, 128),
                          lambda b, t: (b, 0, jnp.maximum(t * r - 1, 0)))
    halo_r = pl.BlockSpec((1, C, 128),
                          lambda b, t: (b, 0, jnp.minimum((t + 1) * r, nblk - 1)))
    stat_spec = pl.BlockSpec((1, 1, 1, 128), lambda b, t: (b, t, 0, 0))
    stat_shape = jax.ShapeDtypeStruct((B, NT, 1, 128), f32)

    def full(a):
        nd = a.ndim
        return pl.BlockSpec(a.shape, lambda b, t, _n=nd: (0,) * _n)

    # ---- pass 1: dilated conv + GroupNorm(1, H) partial stats ----
    h_buf, st_h = pl.pallas_call(
        functools.partial(_conv1_kernel, dil=dil, ksize=ksize, t_valid=t_valid),
        grid=(B, NT),
        in_specs=[halo_l, tile_x, halo_r, full(w1), full(b1)],
        out_specs=[tile_h, stat_spec],
        out_shape=[jax.ShapeDtypeStruct((B, H, Tp), cdt), stat_shape],
        scratch_shapes=[pltpu.VMEM((C, tile + 2 * _HALO), cdt)],
        compiler_params=cparams,
    )(x_pad, x_pad, x_pad, w1, b1)

    ssum = jnp.sum(st_h, axis=(1, 2))                          # (B, 128)
    n1 = jnp.float32(H * t_valid)
    mu1 = ssum[:, 0] / n1
    var1 = jnp.maximum(ssum[:, 1] / n1 - mu1 * mu1, 0.0)
    rstd1 = jax.lax.rsqrt(var1 + 1e-5)
    # Fold per-batch GroupNorm(1,H) stats + gamma/beta into a channel affine.
    g1p = (rstd1[:, None] * g1[None, :]).reshape(B, H, 1)
    be1p = (be1[None, :] - (mu1 * rstd1)[:, None] * g1[None, :]).reshape(B, H, 1)

    vec_h = pl.BlockSpec((1, H, 1), lambda b, t: (b, 0, 0))

    # ---- pass 2: norm -> GELU -> 1x1 conv, GroupNorm(1, 2C) partial stats ----
    a_buf, st_y = pl.pallas_call(
        functools.partial(_mid_kernel, t_valid=t_valid),
        grid=(B, NT),
        in_specs=[tile_h, vec_h, vec_h, full(w2), full(b2)],
        out_specs=[tile_h, stat_spec],
        out_shape=[jax.ShapeDtypeStruct((B, H, Tp), cdt), stat_shape],
        compiler_params=cparams,
    )(h_buf, g1p, be1p, w2, b2)

    ssum2 = jnp.sum(st_y, axis=(1, 2))
    n2 = jnp.float32(2 * C * t_valid)
    mu2 = ssum2[:, 0] / n2
    var2 = jnp.maximum(ssum2[:, 1] / n2 - mu2 * mu2, 0.0)
    rstd2 = jax.lax.rsqrt(var2 + 1e-5)
    # Fold conv2 bias + GroupNorm(1,2C) stats + gamma/beta into scale/shift.
    sc2 = (rstd2[:, None] * g2[None, :]).reshape(B, 2 * C, 1)
    sh2 = ((b2.reshape(-1)[None, :] - mu2[:, None]) * rstd2[:, None] * g2[None, :]
           + be2[None, :]).reshape(B, 2 * C, 1)

    vec_y = pl.BlockSpec((1, 2 * C, 1), lambda b, t: (b, 0, 0))

    # ---- pass 3: 1x1 conv (recompute), norm, GLU, LayerScale, residual ----
    return pl.pallas_call(
        functools.partial(_apply_kernel, t_valid=t_valid),
        grid=(B, NT),
        in_specs=[tile_h, tile_x, full(w2), vec_y, vec_y, full(ls)],
        out_specs=tile_x,
        out_shape=jax.ShapeDtypeStruct((B, C, Tp), x_pad.dtype),
        compiler_params=cparams,
    )(a_buf, x_pad, w2, sc2, sh2, ls)


def dconv_forward(x, layers, *, ksize=3, dilate=True, tile_t=8192,
                  compute_dtype=jnp.bfloat16):
    """DConv forward.  x: (B, C, T) (f32 or bf16 HBM storage both supported).

    Each element of `layers` is a dict of PyTorch-shaped parameters:
      w1 (H, C, ksize), b1/g1/be1 (H,), w2 (2C, H), b2/g2/be2 (2C,), sc (C,).
    """
    assert ksize % 2 == 1
    B, C, T = x.shape
    depth = len(layers)
    dils = tuple((2 ** d) if dilate else 1 for d in range(depth))
    assert max(dils) * (ksize // 2) <= _HALO, "conv halo larger than 128 lanes"

    tp128 = -(-T // 128) * 128
    tile = min(max(128, -(-int(tile_t) // 128) * 128), tp128)
    Tp = -(-T // tile) * tile
    x_pad = jnp.pad(x, ((0, 0), (0, 0), (0, Tp - T))) if Tp != T else x

    cparams = pltpu.CompilerParams(
        dimension_semantics=("parallel", "parallel"),
        vmem_limit_bytes=_vmem_limit_bytes())

    for d, p in enumerate(layers):
        x_pad = _layer_forward(x_pad, p, dil=dils[d], ksize=ksize, t_valid=T,
                               tile=tile, cdt=compute_dtype, cparams=cparams)
    return x_pad[:, :, :T]


# ---------------- pure-JAX reference for verification ----------------
def _ref_layer(x, p, *, dilation, ksize):
    B, C, T = x.shape
    pad = dilation * (ksize // 2)
    xp = jnp.pad(x, ((0, 0), (0, 0), (pad, pad)))
    H = p["w1"].shape[0]
    h = jnp.zeros((B, H, T), jnp.float32)
    for k in range(ksize):
        xs = xp[:, :, k * dilation:k * dilation + T]
        h = h + jnp.einsum("hc,bct->bht", p["w1"][:, :, k], xs)
    h = h + p["b1"][None, :, None]
    mu = jnp.mean(h, axis=(1, 2), keepdims=True)
    var = jnp.mean((h - mu) ** 2, axis=(1, 2), keepdims=True)
    h = (h - mu) * jax.lax.rsqrt(var + 1e-5)
    h = h * p["g1"][None, :, None] + p["be1"][None, :, None]
    h = 0.5 * h * (1.0 + jax.lax.erf(h * jnp.float32(_SQRT1_2)))
    y = jnp.einsum("oh,bht->bot", p["w2"], h) + p["b2"][None, :, None]
    mu2 = jnp.mean(y, axis=(1, 2), keepdims=True)
    var2 = jnp.mean((y - mu2) ** 2, axis=(1, 2), keepdims=True)
    y = (y - mu2) * jax.lax.rsqrt(var2 + 1e-5)
    y = y * p["g2"][None, :, None] + p["be2"][None, :, None]
    a, b = y[:, :C], y[:, C:]
    glu = a * jax.nn.sigmoid(b)
    return x + p["sc"][None, :, None] * glu


def dconv_ref(x, layers, *, ksize=3, dilate=True):
    for d, p in enumerate(layers):
        dilation = 2 ** d if dilate else 1
        x = _ref_layer(x, p, dilation=dilation, ksize=ksize)
    return x


if __name__ == "__main__":
    # Full-precision reference matmuls (otherwise the XLA reference itself is
    # computed at bf16 MXU precision and pollutes the comparison).
    jax.config.update("jax_default_matmul_precision", "highest")

    key = jax.random.PRNGKey(0)
    B, C, T = 2, 16, 300            # T not a multiple of 128 -> masked tail
    compress, depth, ksize = 4, 2, 3
    hidden = C // compress

    keys = jax.random.split(key, 1 + depth)
    x = jax.random.normal(keys[0], (B, C, T), jnp.float32)

    layers = []
    for d in range(depth):
        kk = jax.random.split(keys[1 + d], 9)
        layers.append(dict(
            w1=0.1 * jax.random.normal(kk[0], (hidden, C, ksize), jnp.float32),
            b1=0.1 * jax.random.normal(kk[1], (hidden,), jnp.float32),
            g1=1.0 + 0.1 * jax.random.normal(kk[2], (hidden,), jnp.float32),
            be1=0.1 * jax.random.normal(kk[3], (hidden,), jnp.float32),
            w2=0.1 * jax.random.normal(kk[4], (2 * C, hidden), jnp.float32),
            b2=0.1 * jax.random.normal(kk[5], (2 * C,), jnp.float32),
            g2=1.0 + 0.1 * jax.random.normal(kk[6], (2 * C,), jnp.float32),
            be2=0.1 * jax.random.normal(kk[7], (2 * C,), jnp.float32),
            # "learned" LayerScale ~0.5 so the residual branch is visible in
            # the correctness check (module default init is 1e-4).
            sc=0.5 + 0.1 * jax.random.normal(kk[8], (C,), jnp.float32),
        ))

    y_ref = dconv_ref(x, layers, ksize=ksize)

    # f32 compute path, tile_t=128 -> 3 T tiles: exercises the halo exchange,
    # the masked partial tile and the cross-tile GroupNorm reduction.
    y32 = dconv_forward(x, layers, ksize=ksize, tile_t=128,
                        compute_dtype=jnp.float32)
    y32 = jax.block_until_ready(y32)
    assert y32.shape == (B, C, T)
    err32 = float(jnp.max(jnp.abs(y32 - y_ref)))
    assert err32 < 1e-3, f"f32 path error too large: {err32}"

    # Default bf16 MXU-operand / bf16 intermediate-buffer path.
    ybf = dconv_forward(x, layers, ksize=ksize, tile_t=256,
                        compute_dtype=jnp.bfloat16)
    ybf = jax.block_until_ready(ybf)
    errbf = float(jnp.max(jnp.abs(ybf - y_ref)))
    assert errbf < 5e-2, f"bf16 path error too large: {errbf}"

    print("KERNEL_OK")
</pallas_src>

<mosaic_0001>
module attributes {stable_mosaic.version = 11 : i64} {
  func.func @_conv1_kernel(%arg0: i32, %arg1: i32, %arg2: memref<1x16x128xf32, #tpu.memory_space<vmem>>, %arg3: memref<1x16x128xf32, #tpu.memory_space<vmem>>, %arg4: memref<1x16x128xf32, #tpu.memory_space<vmem>>, %arg5: memref<3x4x16xf32, #tpu.memory_space<vmem>>, %arg6: memref<4x1xf32, #tpu.memory_space<vmem>>, %arg7: memref<1x4x128xf32, #tpu.memory_space<vmem>>, %arg8: memref<1x1x1x128xf32, #tpu.memory_space<vmem>>, %arg9: memref<16x384xf32, #tpu.memory_space<vmem>>) attributes {dimension_semantics = [#tpu.dimension_semantics<parallel>, #tpu.dimension_semantics<parallel>], iteration_bounds = array<i64: 2, 3>, scalar_prefetch = 0 : i64, scratch_operands = 1 : i64, tpu.core_type = #tpu.core_type<tc>, window_params = [{transform_indices = @transform_0, window_bounds = array<i64: 1, 16, 128>}, {transform_indices = @transform_1, window_bounds = array<i64: 1, 16, 128>}, {transform_indices = @transform_2, window_bounds = array<i64: 1, 16, 128>}, {pipeline_mode = #tpu.pipeline_mode<synchronous>, transform_indices = @transform_3, window_bounds = array<i64: 3, 4, 16>}, {pipeline_mode = #tpu.pipeline_mode<synchronous>, transform_indices = @transform_4, window_bounds = array<i64: 4, 1>}, {transform_indices = @transform_5, window_bounds = array<i64: 1, 4, 128>}, {transform_indices = @transform_6, window_bounds = array<i64: 1, 1, 1, 128>}]} {
    %c0 = arith.constant 0 : index
    %c0_0 = arith.constant 0 : index
    %c0_1 = arith.constant 0 : index
    %0 = vector.load %arg3[%c0, %c0_0, %c0_1] : memref<1x16x128xf32, #tpu.memory_space<vmem>>, vector<1x16x128xf32>
    %1 = vector.shape_cast %0 : vector<1x16x128xf32> to vector<16x128xf32>
    %c0_2 = arith.constant 0 : index
    %c128 = arith.constant 128 : index
    %2 = vector.load %arg9[%c0_2, %c128] : memref<16x384xf32, #tpu.memory_space<vmem>>, vector<16x128xf32>
    tpu.vector_store %arg9[%c0_2, %c128], %1 {strides = array<i32>} : memref<16x384xf32, #tpu.memory_space<vmem>>, vector<16x128xf32>,
    %cst = arith.constant 0.000000e+00 : f32
    %3 = vector.broadcast %cst : f32 to vector<16x1xf32>
    %c0_3 = arith.constant 0 : index
    %c0_4 = arith.constant 0 : index
    %c0_5 = arith.constant 0 : index
    %4 = vector.load %arg2[%c0_3, %c0_4, %c0_5] : memref<1x16x128xf32, #tpu.memory_space<vmem>>, vector<1x16x128xf32>
    %5 = vector.shape_cast %4 : vector<1x16x128xf32> to vector<16x128xf32>
    %6 = vector.extract_strided_slice %5 {offsets = [0, 127], sizes = [16, 1], strides = [1, 1]} : vector<16x128xf32> to vector<16x1xf32>
    %c0_i32 = arith.constant 0 : i32
    %7 = arith.cmpi eq, %arg1, %c0_i32 : i32
    %8 = arith.select %7, %3, %6 : vector<16x1xf32>
    %c0_6 = arith.constant 0 : index
    %c127 = arith.constant 127 : index
    %9 = vector.load %arg9[%c0_6, %c127] : memref<16x384xf32, #tpu.memory_space<vmem>>, vector<16x1xf32>
    tpu.vector_store %arg9[%c0_6, %c127], %8 {strides = array<i32>} : memref<16x384xf32, #tpu.memory_space<vmem>>, vector<16x1xf32>,
    %c0_7 = arith.constant 0 : index
    %c0_8 = arith.constant 0 : index
    %c0_9 = arith.constant 0 : index
    %10 = vector.load %arg4[%c0_7, %c0_8, %c0_9] : memref<1x16x128xf32, #tpu.memory_space<vmem>>, vector<1x16x128xf32>
    %11 = vector.shape_cast %10 : vector<1x16x128xf32> to vector<16x128xf32>
    %12 = vector.extract_strided_slice %11 {offsets = [0, 0], sizes = [16, 1], strides = [1, 1]} : vector<16x128xf32> to vector<16x1xf32>
    %c2_i32 = arith.constant 2 : i32
    %13 = arith.cmpi eq, %arg1, %c2_i32 : i32
    %14 = arith.select %13, %3, %12 : vector<16x1xf32>
    %c0_10 = arith.constant 0 : index
    %c256 = arith.constant 256 : index
    %15 = vector.load %arg9[%c0_10, %c256] : memref<16x384xf32, #tpu.memory_space<vmem>>, vector<16x1xf32>
    tpu.vector_store %arg9[%c0_10, %c256], %14 {strides = array<i32>} : memref<16x384xf32, #tpu.memory_space<vmem>>, vector<16x1xf32>,
    %cst_11 = arith.constant 0.000000e+00 : f32
    %16 = vector.broadcast %cst_11 : f32 to vector<4x128xf32>
    %c0_12 = arith.constant 0 : index
    %c127_13 = arith.constant 127 : index
    %17 = vector.load %arg9[%c0_12, %c127_13] : memref<16x384xf32, #tpu.memory_space<vmem>>, vector<16x128xf32>
    %c0_14 = arith.constant 0 : index
    %c0_15 = arith.constant 0 : index
    %c0_16 = arith.constant 0 : index
    %18 = vector.load %arg5[%c0_14, %c0_15, %c0_16] : memref<3x4x16xf32, #tpu.memory_space<vmem>>, vector<1x4x16xf32>
    %19 = vector.shape_cast %18 : vector<1x4x16xf32> to vector<4x16xf32>
    %cst_17 = arith.constant dense<0.000000e+00> : vector<4x128xf32>
    %20 = tpu.matmul %19, %17, %cst_17 {dimension_numbers = #tpu.dot_dimension_numbers<[1], [0], [0], [1], [0, 0, 1, 1], [], []>, precision = #tpu.contract_precision<fp32>} : vector<4x16xf32>, vector<16x128xf32>, vector<4x128xf32> -> vector<4x128xf32>
    %21 = arith.addf %16, %20 : vector<4x128xf32>
    %c0_18 = arith.constant 0 : index
    %c128_19 = arith.constant 128 : index
    %22 = vector.load %arg9[%c0_18, %c128_19] : memref<16x384xf32, #tpu.memory_space<vmem>>, vector<16x128xf32>
    %c1 = arith.constant 1 : index
    %c0_20 = arith.constant 0 : index
    %c0_21 = arith.constant 0 : index
    %23 = vector.load %arg5[%c1, %c0_20, %c0_21] : memref<3x4x16xf32, #tpu.memory_space<vmem>>, vector<1x4x16xf32>
    %24 = vector.shape_cast %23 : vector<1x4x16xf32> to vector<4x16xf32>
    %cst_22 = arith.constant dense<0.000000e+00> : vector<4x128xf32>
    %25 = tpu.matmul %24, %22, %cst_22 {dimension_numbers = #tpu.dot_dimension_numbers<[1], [0], [0], [1], [0, 0, 1, 1], [], []>, precision = #tpu.contract_precision<fp32>} : vector<4x16xf32>, vector<16x128xf32>, vector<4x128xf32> -> vector<4x128xf32>
    %26 = arith.addf %21, %25 : vector<4x128xf32>
    %c0_23 = arith.constant 0 : index
    %c129 = arith.constant 129 : index
    %27 = vector.load %arg9[%c0_23, %c129] : memref<16x384xf32, #tpu.memory_space<vmem>>, vector<16x128xf32>
    %c2 = arith.constant 2 : index
    %c0_24 = arith.constant 0 : index
    %c0_25 = arith.constant 0 : index
    %28 = vector.load %arg5[%c2, %c0_24, %c0_25] : memref<3x4x16xf32, #tpu.memory_space<vmem>>, vector<1x4x16xf32>
    %29 = vector.shape_cast %28 : vector<1x4x16xf32> to vector<4x16xf32>
    %cst_26 = arith.constant dense<0.000000e+00> : vector<4x128xf32>
    %30 = tpu.matmul %29, %27, %cst_26 {dimension_numbers = #tpu.dot_dimension_numbers<[1], [0], [0], [1], [0, 0, 1, 1], [], []>, precision = #tpu.contract_precision<fp32>} : vector<4x16xf32>, vector<16x128xf32>, vector<4x128xf32> -> vector<4x128xf32>
    %31 = arith.addf %26, %30 : vector<4x128xf32>
    %c0_27 = arith.constant 0 : index
    %c0_28 = arith.constant 0 : index
    %32 = vector.load %arg6[%c0_27, %c0_28] : memref<4x1xf32, #tpu.memory_space<vmem>>, vector<4x1xf32>
    %33 = vector.broadcast %32 : vector<4x1xf32> to vector<4x128xf32>
    %34 = arith.addf %31, %33 : vector<4x128xf32>
    %c0_29 = arith.constant 0 : index
    %c0_30 = arith.constant 0 : index
    %c0_31 = arith.constant 0 : index
    %35 = vector.load %arg7[%c0_29, %c0_30, %c0_31] : memref<1x4x128xf32, #tpu.memory_space<vmem>>, vector<1x4x128xf32>
    %36 = vector.shape_cast %35 : vector<1x4x128xf32> to vector<4x128xf32>
    %37 = vector.shape_cast %34 : vector<4x128xf32> to vector<1x4x128xf32>
    tpu.vector_store %arg7[%c0_29, %c0_30, %c0_31], %37 {strides = array<i32>} : memref<1x4x128xf32, #tpu.memory_space<vmem>>, vector<1x4x128xf32>,
    %38 = tpu.iota {dimensions = array<i32: 1>} : vector<1x128xi32>
    %c128_i32 = arith.constant 128 : i32
    %39 = arith.muli %arg1, %c128_i32 : i32
    %40 = vector.broadcast %39 : i32 to vector<1x128xi32>
    %41 = arith.addi %38, %40 : vector<1x128xi32>
    %c300_i32 = arith.constant 300 : i32
    %42 = vector.broadcast %c300_i32 : i32 to vector<1x128xi32>
    %43 = arith.cmpi slt, %41, %42 : vector<1x128xi32>
    %44 = arith.extui %43 : vector<1x128xi1> to vector<1x128xi32>
    %45 = arith.sitofp %44 : vector<1x128xi32> to vector<1x128xf32>
    %46 = vector.broadcast %45 : vector<1x128xf32> to vector<4x128xf32>
    %47 = arith.mulf %34, %46 : vector<4x128xf32>
    %48 = vector.shape_cast %47 : vector<4x128xf32> to vector<1x4x128xf32>
    %cst_32 = arith.constant dense<0.000000e+00> : vector<1xf32>
    %49 = vector.multi_reduction <add>, %48, %cst_32 [1, 2] : vector<1x4x128xf32> to vector<1xf32>
    %50 = vector.shape_cast %49 : vector<1xf32> to vector<1x1x1xf32>
    %51 = vector.extract %50[0, 0, 0] : f32 from vector<1x1x1xf32>
    %52 = arith.mulf %47, %47 : vector<4x128xf32>
    %53 = vector.shape_cast %52 : vector<4x128xf32> to vector<1x4x128xf32>
    %cst_33 = arith.constant dense<0.000000e+00> : vector<1xf32>
    %54 = vector.multi_reduction <add>, %53, %cst_33 [1, 2] : vector<1x4x128xf32> to vector<1xf32>
    %55 = vector.shape_cast %54 : vector<1xf32> to vector<1x1x1xf32>
    %56 = vector.extract %55[0, 0, 0] : f32 from vector<1x1x1xf32>
    %57 = tpu.iota {dimensions = array<i32: 3>} : vector<1x1x1x128xi32>
    %c0_i32_34 = arith.constant 0 : i32
    %58 = vector.broadcast %c0_i32_34 : i32 to vector<1x1x1x128xi32>
    %59 = arith.cmpi eq, %57, %58 : vector<1x1x1x128xi32>
    %cst_35 = arith.constant 0.000000e+00 : f32
    %60 = vector.broadcast %51 : f32 to vector<1x1x1x128xf32>
    %61 = vector.broadcast %cst_35 : f32 to vector<1x1x1x128xf32>
    %62 = arith.select %59, %60, %61 : vector<1x1x1x128xi1>, vector<1x1x1x128xf32>
    %c1_i32 = arith.constant 1 : i32
    %63 = vector.broadcast %c1_i32 : i32 to vector<1x1x1x128xi32>
    %64 = arith.cmpi eq, %57, %63 : vector<1x1x1x128xi32>
    %cst_36 = arith.constant 0.000000e+00 : f32
    %65 = vector.broadcast %56 : f32 to vector<1x1x1x128xf32>
    %66 = vector.broadcast %cst_36 : f32 to vector<1x1x1x128xf32>
    %67 = arith.select %64, %65, %66 : vector<1x1x1x128xi1>, vector<1x1x1x128xf32>
    %68 = arith.addf %62, %67 : vector<1x1x1x128xf32>
    %c0_37 = arith.constant 0 : index
    %c0_38 = arith.constant 0 : index
    %c0_39 = arith.constant 0 : index
    %c0_40 = arith.constant 0 : index
    %69 = vector.load %arg8[%c0_37, %c0_38, %c0_39, %c0_40] : memref<1x1x1x128xf32, #tpu.memory_space<vmem>>, vector<1x1x1x128xf32>
    tpu.vector_store %arg8[%c0_37, %c0_38, %c0_39, %c0_40], %68 {strides = array<i32>} : memref<1x1x1x128xf32, #tpu.memory_space<vmem>>, vector<1x1x1x128xf32>,
    return
  }
  func.func @transform_0(%arg0: i32, %arg1: i32) -> (i32, i32, i32) {
    %c1_i32 = arith.constant 1 : i32
    %0 = arith.muli %arg1, %c1_i32 : i32
    %c1_i32_0 = arith.constant 1 : i32
    %1 = arith.subi %0, %c1_i32_0 : i32
    %c0_i32 = arith.constant 0 : i32
    %2 = arith.maxsi %1, %c0_i32 : i32
    %c0_i32_1 = arith.constant 0 : i32
    %c0_i32_2 = arith.constant 0 : i32
    return %arg0, %c0_i32_1, %2 : i32, i32, i32
  }
  func.func @transform_1(%arg0: i32, %arg1: i32) -> (i32, i32, i32) {
    %c0_i32 = arith.constant 0 : i32
    %c0_i32_0 = arith.constant 0 : i32
    return %arg0, %c0_i32, %arg1 : i32, i32, i32
  }
  func.func @transform_2(%arg0: i32, %arg1: i32) -> (i32, i32, i32) {
    %c1_i32 = arith.constant 1 : i32
    %0 = arith.addi %arg1, %c1_i32 : i32
    %c1_i32_0 = arith.constant 1 : i32
    %1 = arith.muli %0, %c1_i32_0 : i32
    %c2_i32 = arith.constant 2 : i32
    %2 = arith.minsi %1, %c2_i32 : i32
    %c0_i32 = arith.constant 0 : i32
    %c0_i32_1 = arith.constant 0 : i32
    return %arg0, %c0_i32, %2 : i32, i32, i32
  }
  func.func @transform_3(%arg0: i32, %arg1: i32) -> (i32, i32, i32) {
    %c0_i32 = arith.constant 0 : i32
    %c0_i32_0 = arith.constant 0 : i32
    %c0_i32_1 = arith.constant 0 : i32
    %c0_i32_2 = arith.constant 0 : i32
    return %c0_i32, %c0_i32_0, %c0_i32_1 : i32, i32, i32
  }
  func.func @transform_4(%arg0: i32, %arg1: i32) -> (i32, i32) {
    %c0_i32 = arith.constant 0 : i32
    %c0_i32_0 = arith.constant 0 : i32
    %c0_i32_1 = arith.constant 0 : i32
    return %c0_i32, %c0_i32_0 : i32, i32
  }
  func.func @transform_5(%arg0: i32, %arg1: i32) -> (i32, i32, i32) {
    %c0_i32 = arith.constant 0 : i32
    %c0_i32_0 = arith.constant 0 : i32
    return %arg0, %c0_i32, %arg1 : i32, i32, i32
  }
  func.func @transform_6(%arg0: i32, %arg1: i32) -> (i32, i32, i32, i32) {
    %c0_i32 = arith.constant 0 : i32
    %c0_i32_0 = arith.constant 0 : i32
    %c0_i32_1 = arith.constant 0 : i32
    return %arg0, %arg1, %c0_i32, %c0_i32_0 : i32, i32, i32, i32
  }
}

</mosaic_0001>

<llo_original>
// kernel: tpu_custom_call.1
$region0: #{tpu_custom_call.1}
  #allocation0 [shape = 'u32[]', space=smem, size = 0x4, offset = 0x4, fixed_abs, tag = 'smem constant byte address 0x4 - core index']
  #allocation1 [shape = 'u32[72,128]{1,0:T(1,128)}', space=vmem, size = 0x9000, scoped, tag = 'internal scratch']
  #allocation2 [shape = 'f32[16,384]{1,0:T(8,128)}', space=vmem, size = 0x6000, scoped, tag = 'scratch operand']
  %s0 = inlined_call_operand.hbm [shape: f32[2,16,384], index: 0, kind: input, shape index: {}]
  %s1 = inlined_call_operand.hbm [shape: f32[2,16,384], index: 1, kind: input, shape index: {}]
  %s2 = inlined_call_operand.hbm [shape: f32[2,16,384], index: 2, kind: input, shape index: {}]
  %s3 = inlined_call_operand.hbm [shape: f32[3,4,16], index: 3, kind: input, shape index: {}]
  %s4 = inlined_call_operand.vmem [shape: f32[4,1], index: 4, kind: input, shape index: {}]
  %s5 = inlined_call_operand.hbm [shape: f32[2,4,384], index: 5, kind: output, shape index: {0}]
  %s6 = inlined_call_operand.hbm [shape: f32[2,3,1,128], index: 6, kind: output, shape index: {1}]
  %7 = xla_tuple %s5, %s6
  %s8 = sld [smem:[#allocation0]]
  $region77: #{tpu_custom_call.1} parent=0
    _
  %s10 = ssub.s32 1, %s8
  %s11 = scalar_select 0, %s10, %s8
  $region1: #{tpu_custom_call.1} parent=0
    #allocation3 [shape = 'u8[16384]{0}', space=vmem, size = 0x4000, scoped, tag = 'input window, operand 0']
    #allocation4 [shape = 's32[2]{0}', space=sflag, size = 0x8, scoped, tag = 'scoped memory for tpu_custom_call.1']
    #allocation5 [shape = 's32[2]{0}', space=sflag, size = 0x8, scoped, tag = 'scoped memory for tpu_custom_call.1']
    #allocation6 [shape = 'u8[16384]{0}', space=vmem, size = 0x4000, scoped, tag = 'input window, operand 1']
    #allocation7 [shape = 's32[2]{0}', space=sflag, size = 0x8, scoped, tag = 'scoped memory for tpu_custom_call.1']
    #allocation8 [shape = 'u8[16384]{0}', space=vmem, size = 0x4000, scoped, tag = 'input window, operand 2']
    #allocation9 [shape = 'u8[6144]{0}', space=vmem, size = 0x1800, scoped, tag = 'input window, operand 3, single buffered']
    #allocation10 [shape = 's32[1]{0}', space=sflag, size = 0x4, scoped, tag = 'scoped memory for tpu_custom_call.1']
    #allocation11 [shape = 'u8[4096]{0}', space=vmem, size = 0x1000, scoped, tag = 'output window, operand 0']
    #allocation12 [shape = 'u8[1024]{0}', space=vmem, size = 0x400, scoped, tag = 'output window, operand 1']
    #allocation13 [shape = 's32[2]{0}', space=sflag, size = 0x8, scoped, tag = 'scoped memory for tpu_custom_call.1']
    %12 = vsyncpa [#allocation4], 0
    %s13 = scalar_lea.sflag [#allocation4], 1
    %14 = vsyncpa %s13, 0
    %15 = vsyncpa [#allocation7], 0
    %s16 = scalar_lea.sflag [#allocation7], 1
    %17 = vsyncpa %s16, 0
    %18 = vsyncpa [#allocation10], 0
    %19 = vsyncpa [#allocation5], 0
    %s20 = scalar_lea.sflag [#allocation5], 1
    %21 = vsyncpa %s20, 0
    %22 = vsyncpa [#allocation13], 0
    %s23 = scalar_lea.sflag [#allocation13], 1
    %24 = vsyncpa %s23, 0
    loop: start=0, step=1, limit=8
    $region2: #{tpu_custom_call.1} parent=1 // loop_pre_header
      _
    $region3: #{tpu_custom_call.1} parent=1 // loop_header
      %s26 = sphi 0, %s30
      %p27 = scmp.ge.s32.totalorder %s26, 8
      %s33 = sphi 0, %s45
      %s34 = sphi 0, %s41
      %s35 = sphi 0, %s33
      %s36 = sphi 0, %s34
      %s37 = sphi 0, %s35
      %s38 = sphi 0, %s36
      %s56 = sphi 0, %s58
      %s59 = sphi 0, %s56
      %s60 = sphi 0, %s59
      %s76 = sphi 0, %s60
      %s84 = sphi 0, %s86
      %s87 = sphi 0, %s84
      %s88 = sphi 0, %s87
      %s104 = sphi 0, %s88
      %s118 = sphi 0, %s120
      %s121 = sphi 0, %s118
      %s122 = sphi 0, %s121
      %s138 = sphi 0, %s122
      %s142 = sphi 0, %s142
      %s144 = sphi 0, %s142
      %s145 = sphi 0, %s144
      %s159 = sphi 0, %s145
      %s163 = sphi 0, %s163
      %s165 = sphi 0, %s163
      %s166 = sphi 0, %s165
      %s180 = sphi 0, %s166
      %s188 = sphi 0, %s190
      %s191 = sphi 0, %s188
      %s192 = sphi 0, %s191
      %s208 = sphi 0, %s192
      %s216 = sphi 0, %s218
      %s219 = sphi 0, %s216
      %s220 = sphi 0, %s219
      %s236 = sphi 0, %s220
    $region4: #{tpu_custom_call.1} parent=1 // loop_header_branch
      %29 = sbr.rel (%p27) target = $region8
    $region5: #{tpu_custom_call.1} parent=1 // loop_body
      %s31 = ssub.s32 %s26, 1
      %s32 = ssub.s32 %s26, 2
      %s39 = sadd.s32 1, %s34
      %p40 = scmp.ge.s32.totalorder %s39, 3
      %s41 = scalar_select %p40, 0, %s39
      %s42 = sadd.s32 1, %s33
      %s43 = scalar_select %p40, %s42, %s33
      %p44 = scmp.ge.s32.totalorder %s43, 2
      %s45 = scalar_select %p44, 0, %s43
      %s46 = ssub.s32 %s34, 1
      %p47 = scmp.gt.s32.totalorder %s46, 0
      %s48 = scalar_select %p47, %s46, 0
      %s49 = ssub.s32 %s41, 1
      %p50 = scmp.gt.s32.totalorder %s49, 0
      %s51 = scalar_select %p50, %s49, 0
      %s52 = ssub.s32 %s33, %s45
      %s53 = ssub.s32 %s48, %s51
      %s54 = sor.u32 %s52, %s53
      %p55 = scmp.eq.s32.totalorder %s54, 0
      %s57 = sadd.s32 %s56, 1
      %s58 = scalar_select %p55, %s56, %s57
      %p61 = pneg %p55
      %p62 = scmp.eq.s32.totalorder %s26, 5
      %p63 = por %p61, %p62
      %p64 = scmp.ne.s32.totalorder %s56, %s59
      %p65 = scmp.eq.s32.totalorder %s26, 0
      %p66 = por %p64, %p65
      %p67 = scmp.ne.s32.totalorder %s56, %s59
      %p68 = scmp.eq.s32.totalorder %s31, 5
      %p69 = por %p67, %p68
      %p70 = scmp.ne.s32.totalorder %s59, %s60
      %p71 = scmp.eq.s32.totalorder %s31, 0
      %p72 = por %p70, %p71
      %p73 = scmp.ne.s32.totalorder %s59, %s60
      %p74 = scmp.eq.s32.totalorder %s32, 5
      %p75 = por %p73, %p74
      %p77 = scmp.ne.s32.totalorder %s60, %s76
      %p78 = scmp.eq.s32.totalorder %s32, 0
      %p79 = por %p77, %p78
      %s80 = ssub.s32 %s33, %s45
      %s81 = ssub.s32 %s34, %s41
      %s82 = sor.u32 %s80, %s81
      %p83 = scmp.eq.s32.totalorder %s82, 0
      %s85 = sadd.s32 %s84, 1
      %s86 = scalar_select %p83, %s84, %s85
      %p89 = pneg %p83
      %p90 = scmp.eq.s32.totalorder %s26, 5
      %p91 = por %p89, %p90
      %p92 = scmp.ne.s32.totalorder %s84, %s87
      %p93 = scmp.eq.s32.totalorder %s26, 0
      %p94 = por %p92, %p93
      %p95 = scmp.ne.s32.totalorder %s84, %s87
      %p96 = scmp.eq.s32.totalorder %s31, 5
      %p97 = por %p95, %p96
      %p98 = scmp.ne.s32.totalorder %s87, %s88
      %p99 = scmp.eq.s32.totalorder %s31, 0
      %p100 = por %p98, %p99
      %p101 = scmp.ne.s32.totalorder %s87, %s88
      %p102 = scmp.eq.s32.totalorder %s32, 5
      %p103 = por %p101, %p102
      %p105 = scmp.ne.s32.totalorder %s88, %s104
      %p106 = scmp.eq.s32.totalorder %s32, 0
      %p107 = por %p105, %p106
      %s108 = sadd.s32 %s34, 1
      %p109 = scmp.lt.s32.totalorder %s108, 2
      %s110 = scalar_select %p109, %s108, 2
      %s111 = sadd.s32 %s41, 1
      %p112 = scmp.lt.s32.totalorder %s111, 2
      %s113 = scalar_select %p112, %s111, 2
      %s114 = ssub.s32 %s33, %s45
      %s115 = ssub.s32 %s110, %s113
      %s116 = sor.u32 %s114, %s115
      %p117 = scmp.eq.s32.totalorder %s116, 0
      %s119 = sadd.s32 %s118, 1
      %s120 = scalar_select %p117, %s118, %s119
      %p123 = pneg %p117
      %p124 = scmp.eq.s32.totalorder %s26, 5
      %p125 = por %p123, %p124
      %p126 = scmp.ne.s32.totalorder %s118, %s121
      %p127 = scmp.eq.s32.totalorder %s26, 0
      %p128 = por %p126, %p127
      %p129 = scmp.ne.s32.totalorder %s118, %s121
      %p130 = scmp.eq.s32.totalorder %s31, 5
      %p131 = por %p129, %p130
      %p132 = scmp.ne.s32.totalorder %s121, %s122
      %p133 = scmp.eq.s32.totalorder %s31, 0
      %p134 = por %p132, %p133
      %p135 = scmp.ne.s32.totalorder %s121, %s122
      %p136 = scmp.eq.s32.totalorder %s32, 5
      %p137 = por %p135, %p136
      %p139 = scmp.ne.s32.totalorder %s122, %s138
      %p140 = scmp.eq.s32.totalorder %s32, 0
      %p141 = por %p139, %p140
      %s143 = sadd.s32 %s142, 1
      %p146 = scmp.eq.s32.totalorder %s26, 5
      %p147 = scmp.ne.s32.totalorder %s142, %s144
      %p148 = scmp.eq.s32.totalorder %s26, 0
      %p149 = por %p147, %p148
      %p150 = scmp.ne.s32.totalorder %s142, %s144
      %p151 = scmp.eq.s32.totalorder %s31, 5
      %p152 = por %p150, %p151
      %p153 = scmp.ne.s32.totalorder %s144, %s145
      %p154 = scmp.eq.s32.totalorder %s31, 0
      %p155 = por %p153, %p154
      %p156 = scmp.ne.s32.totalorder %s144, %s145
      %p157 = scmp.eq.s32.totalorder %s32, 5
      %p158 = por %p156, %p157
      %p160 = scmp.ne.s32.totalorder %s145, %s159
      %p161 = scmp.eq.s32.totalorder %s32, 0
      %p162 = por %p160, %p161
      %s164 = sadd.s32 %s163, 1
      %p167 = scmp.eq.s32.totalorder %s26, 5
      %p168 = scmp.ne.s32.totalorder %s163, %s165
      %p169 = scmp.eq.s32.totalorder %s26, 0
      %p170 = por %p168, %p169
      %p171 = scmp.ne.s32.totalorder %s163, %s165
      %p172 = scmp.eq.s32.totalorder %s31, 5
      %p173 = por %p171, %p172
      %p174 = scmp.ne.s32.totalorder %s165, %s166
      %p175 = scmp.eq.s32.totalorder %s31, 0
      %p176 = por %p174, %p175
      %p177 = scmp.ne.s32.totalorder %s165, %s166
      %p178 = scmp.eq.s32.totalorder %s32, 5
      %p179 = por %p177, %p178
      %p181 = scmp.ne.s32.totalorder %s166, %s180
      %p182 = scmp.eq.s32.totalorder %s32, 0
      %p183 = por %p181, %p182
      %s184 = ssub.s32 %s33, %s45
      %s185 = ssub.s32 %s34, %s41
      %s186 = sor.u32 %s184, %s185
      %p187 = scmp.eq.s32.totalorder %s186, 0
      %s189 = sadd.s32 %s188, 1
      %s190 = scalar_select %p187, %s188, %s189
      %p193 = pneg %p187
      %p194 = scmp.eq.s32.totalorder %s26, 5
      %p195 = por %p193, %p194
      %p196 = scmp.ne.s32.totalorder %s188, %s191
      %p197 = scmp.eq.s32.totalorder %s26, 0
      %p198 = por %p196, %p197
      %p199 = scmp.ne.s32.totalorder %s188, %s191
      %p200 = scmp.eq.s32.totalorder %s31, 5
      %p201 = por %p199, %p200
      %p202 = scmp.ne.s32.totalorder %s191, %s192
      %p203 = scmp.eq.s32.totalorder %s31, 0
      %p204 = por %p202, %p203
      %p205 = scmp.ne.s32.totalorder %s191, %s192
      %p206 = scmp.eq.s32.totalorder %s32, 5
      %p207 = por %p205, %p206
      %p209 = scmp.ne.s32.totalorder %s192, %s208
      %p210 = scmp.eq.s32.totalorder %s32, 0
      %p211 = por %p209, %p210
      %s212 = ssub.s32 %s33, %s45
      %s213 = ssub.s32 %s34, %s41
      %s214 = sor.u32 %s212, %s213
      %p215 = scmp.eq.s32.totalorder %s214, 0
      %s217 = sadd.s32 %s216, 1
      %s218 = scalar_select %p215, %s216, %s217
      %p221 = pneg %p215
      %p222 = scmp.eq.s32.totalorder %s26, 5
      %p223 = por %p221, %p222
      %p224 = scmp.ne.s32.totalorder %s216, %s219
      %p225 = scmp.eq.s32.totalorder %s26, 0
      %p226 = por %p224, %p225
      %p227 = scmp.ne.s32.totalorder %s216, %s219
      %p228 = scmp.eq.s32.totalorder %s31, 5
      %p229 = por %p227, %p228
      %p230 = scmp.ne.s32.totalorder %s219, %s220
      %p231 = scmp.eq.s32.totalorder %s31, 0
      %p232 = por %p230, %p231
      %p233 = scmp.ne.s32.totalorder %s219, %s220
      %p234 = scmp.eq.s32.totalorder %s32, 5
      %p235 = por %p233, %p234
      %p237 = scmp.ne.s32.totalorder %s220, %s236
      %p238 = scmp.eq.s32.totalorder %s32, 0
      %p239 = por %p237, %p238
      %p240 = scmp.le.s32.totalorder 1, %s26
      %p241 = scmp.lt.s32.totalorder %s26, 7
      %p242 = pnand %p240, %p241
      %p243 = pneg %p242
      // Predicated region
      $region9: #{tpu_custom_call.1} parent=5 // pred_check
        _
      $region10: #{tpu_custom_call.1} parent=5 // pred_check_branch
        %245 = sbr.rel (%p242) target = $region12
      $region11: #{tpu_custom_call.1} parent=5 // pred_region
        %s246 = ssub.s32 %s26, 1
        // Predicated region
        $region13: #{tpu_custom_call.1} parent=11 // pred_check
          %p247 = pneg %p155
        $region14: #{tpu_custom_call.1} parent=11 // pred_check_branch
          %249 = sbr.rel (%p247) target = $region16
        $region15: #{tpu_custom_call.1} parent=11 // pred_region
          %251 = vsyncadd [#allocation10], 0
          %s252 = sshll.u32 %s3, 4
          %s253 = int_to_ptr.hbm [resolvable:$true] %s252
          %s254 = sshll.u32 [#allocation9], 4
          %s255 = int_to_ptr.vmem [resolvable:$true] %s254
          %260 = dma.hbm_to_vmem [thread:$0]  %s253, 192, %s255, [#allocation10], 64, 64, 4
        $region16: #{tpu_custom_call.1} parent=11 // pred_fallthru
          _
        // Predicated region
        $region17: #{tpu_custom_call.1} parent=11 // pred_check
          %p261 = pneg %p176
        $region18: #{tpu_custom_call.1} parent=11 // pred_check_branch
          %263 = sbr.rel (%p261) target = $region20
        $region19: #{tpu_custom_call.1} parent=11 // pred_region
          _
        $region20: #{tpu_custom_call.1} parent=11 // pred_fallthru
          _
      $region12: #{tpu_custom_call.1} parent=5 // pred_fallthru
        _
      %p264 = scmp.lt.s32.totalorder %s26, 6
      // Predicated region
      $region21: #{tpu_custom_call.1} parent=5 // pred_check
        %p265 = pneg %p264
      $region22: #{tpu_custom_call.1} parent=5 // pred_check_branch
        %267 = sbr.rel (%p265) target = $region24
      $region23: #{tpu_custom_call.1} parent=5 // pred_region
        // Predicated region
        $region25: #{tpu_custom_call.1} parent=23 // pred_check
          %p268 = pneg %p66
        $region26: #{tpu_custom_call.1} parent=23 // pred_check_branch
          %270 = sbr.rel (%p268) target = $region28
        $region27: #{tpu_custom_call.1} parent=23 // pred_region
          %s271 = sand.u32 %s56, 1
          %s272 = scalar_lea.sflag [#allocation4], %s271
          %s273 = sand.u32 %s56, 1
          %s274 = smul.addr %s273, 16
          %s275 = scalar_lea.vmem [#allocation3], %s274
          %s276 = ssub.s32 %s34, 1
          %p277 = scmp.gt.s32.totalorder %s276, 0
          %s278 = scalar_select %p277, %s276, 0
          %280 = vsyncadd %s272, 0
          %s281 = smul.addr %s33, 6
          %s282 = sadd.s32 %s278, %s281
          %s283 = smul.addr %s282, 8
          %s284 = scalar_lea.hbm %s0, %s283
          %s285 = sshll.u32 %s284, 4
          %s286 = int_to_ptr.hbm [resolvable:$true] %s285
          %s287 = sshll.u32 %s275, 4
          %s288 = int_to_ptr.vmem [resolvable:$true] %s287
          %293 = dma.hbm_to_vmem [thread:$0]  %s286, 256, %s288, %s272, 384, 128, 8
        $region28: #{tpu_custom_call.1} parent=23 // pred_fallthru
          _
        // Predicated region
        $region29: #{tpu_custom_call.1} parent=23 // pred_check
          %p294 = pneg %p94
        $region30: #{tpu_custom_call.1} parent=23 // pred_check_branch
          %296 = sbr.rel (%p294) target = $region32
        $region31: #{tpu_custom_call.1} parent=23 // pred_region
          %s297 = sand.u32 %s26, 1
          %s298 = scalar_lea.sflag [#allocation7], %s297
          %s299 = sand.u32 %s84, 1
          %s300 = smul.addr %s299, 16
          %s301 = scalar_lea.vmem [#allocation6], %s300
          %303 = vsyncadd %s298, 0
          %s304 = smul.addr %s33, 6
          %s305 = sadd.s32 %s34, %s304
          %s306 = smul.addr %s305, 8
          %s307 = scalar_lea.hbm %s1, %s306
          %s308 = sshll.u32 %s307, 4
          %s309 = int_to_ptr.hbm [resolvable:$true] %s308
          %s310 = sshll.u32 %s301, 4
          %s311 = int_to_ptr.vmem [resolvable:$true] %s310
          %316 = dma.hbm_to_vmem [thread:$0]  %s309, 256, %s311, %s298, 384, 128, 8
        $region32: #{tpu_custom_call.1} parent=23 // pred_fallthru
          _
        // Predicated region
        $region33: #{tpu_custom_call.1} parent=23 // pred_check
          %p317 = pneg %p128
        $region34: #{tpu_custom_call.1} parent=23 // pred_check_branch
          %319 = sbr.rel (%p317) target = $region36
        $region35: #{tpu_custom_call.1} parent=23 // pred_region
          %s320 = sand.u32 %s26, 1
          %s321 = scalar_lea.sflag [#allocation7], %s320
          %s322 = sand.u32 %s118, 1
          %s323 = smul.addr %s322, 16
          %s324 = scalar_lea.vmem [#allocation8], %s323
          %s325 = sadd.s32 %s34, 1
          %p326 = scmp.lt.s32.totalorder %s325, 2
          %s327 = scalar_select %p326, %s325, 2
          %329 = vsyncadd %s321, 0
          %s330 = smul.addr %s33, 6
          %s331 = sadd.s32 %s327, %s330
          %s332 = smul.addr %s331, 8
          %s333 = scalar_lea.hbm %s2, %s332
          %s334 = sshll.u32 %s333, 4
          %s335 = int_to_ptr.hbm [resolvable:$true] %s334
          %s336 = sshll.u32 %s324, 4
          %s337 = int_to_ptr.vmem [resolvable:$true] %s336
          %342 = dma.hbm_to_vmem [thread:$0]  %s335, 256, %s337, %s321, 384, 128, 8
        $region36: #{tpu_custom_call.1} parent=23 // pred_fallthru
          _
      $region24: #{tpu_custom_call.1} parent=5 // pred_fallthru
        _
      %p343 = scmp.le.s32.totalorder 1, %s26
      %p344 = scmp.lt.s32.totalorder %s26, 7
      %p345 = pnand %p343, %p344
      %p346 = pneg %p345
      // Predicated region
      $region37: #{tpu_custom_call.1} parent=5 // pred_check
        _
      $region38: #{tpu_custom_call.1} parent=5 // pred_check_branch
        %348 = sbr.rel (%p345) target = $region40
      $region39: #{tpu_custom_call.1} parent=5 // pred_region
        %s349 = ssub.s32 %s26, 1
        %s350 = sand.u32 %s59, 1
        %s351 = scalar_lea.sflag [#allocation4], %s350
        %s352 = sand.u32 %s59, 1
        %s353 = smul.addr %s352, 16
        %s354 = scalar_lea.vmem [#allocation3], %s353
        // Predicated region
        $region41: #{tpu_custom_call.1} parent=39 // pred_check
          %p355 = pneg %p72
        $region42: #{tpu_custom_call.1} parent=39 // pred_check_branch
          %357 = sbr.rel (%p355) target = $region44
        $region43: #{tpu_custom_call.1} parent=39 // pred_region
          %359 = dma.done %s351, 256
        $region44: #{tpu_custom_call.1} parent=39 // pred_fallthru
          _
        %s360 = sand.u32 %s31, 1
        %s361 = scalar_lea.sflag [#allocation7], %s360
        %s362 = sand.u32 %s87, 1
        %s363 = smul.addr %s362, 16
        %s364 = scalar_lea.vmem [#allocation6], %s363
        // Predicated region
        $region45: #{tpu_custom_call.1} parent=39 // pred_check
          %p365 = pneg %p100
        $region46: #{tpu_custom_call.1} parent=39 // pred_check_branch
          %367 = sbr.rel (%p365) target = $region48
        $region47: #{tpu_custom_call.1} parent=39 // pred_region
          %369 = dma.done %s361, 256
        $region48: #{tpu_custom_call.1} parent=39 // pred_fallthru
          _
        %s370 = sand.u32 %s31, 1
        %s371 = scalar_lea.sflag [#allocation7], %s370
        %s372 = sand.u32 %s121, 1
        %s373 = smul.addr %s372, 16
        %s374 = scalar_lea.vmem [#allocation8], %s373
        // Predicated region
        $region49: #{tpu_custom_call.1} parent=39 // pred_check
          %p375 = pneg %p134
        $region50: #{tpu_custom_call.1} parent=39 // pred_check_branch
          %377 = sbr.rel (%p375) target = $region52
        $region51: #{tpu_custom_call.1} parent=39 // pred_region
          %379 = dma.done %s371, 256
        $region52: #{tpu_custom_call.1} parent=39 // pred_fallthru
          _
        // Predicated region
        $region53: #{tpu_custom_call.1} parent=39 // pred_check
          %p380 = pneg %p155
        $region54: #{tpu_custom_call.1} parent=39 // pred_check_branch
          %382 = sbr.rel (%p380) target = $region56
        $region55: #{tpu_custom_call.1} parent=39 // pred_region
          %384 = dma.done [#allocation10], 192
        $region56: #{tpu_custom_call.1} parent=39 // pred_fallthru
          _
        %s385 = sand.u32 %s59, 1
        %s386 = scalar_lea.sflag [#allocation4], %s385
        %s387 = sand.u32 %s59, 1
        %s388 = smul.addr %s387, 16
        %s389 = scalar_lea.vmem [#allocation3], %s388
        %p390 = pneg %p72
        %p391 = pneg %p69
        %s392 = sand.u32 %s31, 1
        %s393 = scalar_lea.sflag [#allocation7], %s392
        %s394 = sand.u32 %s87, 1
        %s395 = smul.addr %s394, 16
        %s396 = scalar_lea.vmem [#allocation6], %s395
        %p397 = pneg %p100
        %p398 = pneg %p97
        %s399 = sand.u32 %s31, 1
        %s400 = scalar_lea.sflag [#allocation7], %s399
        %s401 = sand.u32 %s121, 1
        %s402 = smul.addr %s401, 16
        %s403 = scalar_lea.vmem [#allocation8], %s402
        %p404 = pneg %p134
        %p405 = pneg %p131
        %p406 = pneg %p155
        %p407 = pneg %p152
        %p408 = pneg %p176
        %p409 = pneg %p173
        %p410 = pneg %p204
        %p411 = pneg %p201
        %s412 = sand.u32 %s191, 1
        %s413 = scalar_lea.sflag [#allocation5], %s412
        %s414 = sand.u32 %s191, 1
        %s415 = smul.addr %s414, 4
        %s416 = scalar_lea.vmem [#allocation11], %s415
        %p417 = pneg %p232
        %p418 = pneg %p229
        %s419 = sand.u32 %s219, 1
        %s420 = scalar_lea.sflag [#allocation13], %s419
        %s421 = sand.u32 %s219, 1
        %s422 = scalar_lea.vmem [#allocation12], %s421
        %s423 = ssub.s32 %s36, 1
        %p424 = scmp.gt.s32.totalorder %s423, 0
        %s425 = scalar_select %p424, %s423, 0
        %s426 = sadd.s32 %s36, 1
        %p427 = scmp.lt.s32.totalorder %s426, 2
        %s428 = scalar_select %p427, %s426, 2
        %v429 = vld [vmem:[%s364] sm:$0xff]
        %v430 = vld [vmem:[%s364 + $0x8] sm:$0xff]
        %431 = vst [vmem:[#allocation2 + $0x8] sm:$0xff] %v429
        %432 = vst [vmem:[#allocation2 + $0x20] sm:$0xff] %v430
        %v433 = vld [vmem:[%s354] sm:$0xff]
        %v434 = vld [vmem:[%s354 + $0x8] sm:$0xff]
        %p435 = scmp.eq.s32.totalorder %s36, 0
        %s436 = scalar_select %p435, 1, 0
        %v437 = vstv %s436
        %vm438 = vcmp.eq.s32.totalorder %v437, 1
        %v439 = vsel %vm438, 0.0, %v433
        %v440 = vsel %vm438, 0.0, %v434
        %vm441 = vcmask 1048568
        %442 = vst.msk [vmem:[#allocation2] sm:$0xff] %vm441, %v439
        %443 = vst.msk [vmem:[#allocation2 + $0x18] sm:$0xff] %vm441, %v440
        %v444 = vld [vmem:[%s374] sm:$0xff]
        %v445 = vld [vmem:[%s374 + $0x8] sm:$0xff]
        %p446 = scmp.eq.s32.totalorder %s36, 2
        %s447 = scalar_select %p446, 1, 0
        %v448 = vstv %s447
        %vm449 = vcmp.eq.s32.totalorder %v448, 1
        %v450 = vsel %vm449, 0.0, %v444
        %v451 = vsel %vm449, 0.0, %v445
        %vm452 = vcmask 7168
        %453 = vst.msk [vmem:[#allocation2 + $0x10] sm:$0xff] %vm452, %v450
        %454 = vst.msk [vmem:[#allocation2 + $0x28] sm:$0xff] %vm452, %v451
        %v455 = vld [vmem:[#allocation2] sm:$0xff]
        %v456 = vld [vmem:[#allocation2 + $0x8] sm:$0xff]
        %v457 = vld [vmem:[#allocation2 + $0x18] sm:$0xff]
        %v458 = vld [vmem:[#allocation2 + $0x20] sm:$0xff]
        %v459 = vld [vmem:[#allocation9] sm:$0xf]
        %s460 = scalar_lea.vmem [#allocation9], 4
        %v461 = vld [vmem:[%s460] sm:$0xf]
        %vm462 = vcmask 130048
        %v464 = vsel %vm462, %v461, 0
        %466 = vmatpush.msra.mxu0 0.0
        %467 = vmatpush.msra.mxu0 0.0
        %468 = vmatpush.msra.mxu0 0.0
        %469 = vmatpush.msra.mxu0 0.0
        %470 = vmatpush.msra.mxu0 0.0
        %471 = vmatpush.msra.mxu0 0.0
        %472 = vmatpush.msra.mxu0 0.0
        %473 = vmatpush.msra.mxu0 0.0
        %474 = vmatpush.msra.mxu0 0.0
        %475 = vmatpush.msra.mxu0 0.0
        %476 = vmatpush.msra.mxu0 0.0
        %477 = vmatpush.msra.mxu0 0.0
        %478 = vmatpush.msra.mxu0 0.0
        %479 = vmatpush.msra.mxu0 0.0
        %v480 = vand.u32 %v458, 4294901760
        %481 = vmatpush.msra.mxu0 %v480
        %v482 = vand.u32 %v456, 4294901760
        %483 = vmatpush.msra.mxu0 %v482
        %v484 = vand.u32 %v464, 4294901760
        %v485 = vsub.f32 %v464, %v484
        %v486 = vand.u32 %v485, 4294901760
        %v487 = vsub.f32 %v485, %v486
        %v488 = vand.u32 %v487, 4294901760
        %489 = vmatmul.f32.gmra.mxu0 %v488
        %v490 = vpop.f32.mrf.mxu0
        %v491 = vadd.f32 0.0, %v490
        %492 = vdwg.mxu0
        %493 = vmatpush.msra.mxu0 0.0
        %494 = vmatpush.msra.mxu0 0.0
        %495 = vmatpush.msra.mxu0 0.0
        %496 = vmatpush.msra.mxu0 0.0
        %497 = vmatpush.msra.mxu0 0.0
        %498 = vmatpush.msra.mxu0 0.0
        %499 = vmatpush.msra.mxu0 0.0
        %500 = vmatpush.msra.mxu0 0.0
        %501 = vmatpush.msra.mxu0 0.0
        %502 = vmatpush.msra.mxu0 0.0
        %503 = vmatpush.msra.mxu0 0.0
        %504 = vmatpush.msra.mxu0 0.0
        %505 = vmatpush.msra.mxu0 0.0
        %506 = vmatpush.msra.mxu0 0.0
        %v507 = vand.u32 %v458, 4294901760
        %v508 = vsub.f32 %v458, %v507
        %v509 = vand.u32 %v508, 4294901760
        %v510 = vsub.f32 %v508, %v509
        %v511 = vand.u32 %v510, 4294901760
        %512 = vmatpush.msra.mxu0 %v511
        %v513 = vand.u32 %v456, 4294901760
        %v514 = vsub.f32 %v456, %v513
        %v515 = vand.u32 %v514, 4294901760
        %v516 = vsub.f32 %v514, %v515
        %v517 = vand.u32 %v516, 4294901760
        %518 = vmatpush.msra.mxu0 %v517
        %v519 = vand.u32 %v464, 4294901760
        %520 = vmatmul.f32.gmra.mxu0 %v519
        %v521 = vpop.f32.mrf.mxu0
        %v522 = vadd.f32 %v491, %v521
        %523 = vdwg.mxu0
        %524 = vmatpush.msra.mxu0 0.0
        %525 = vmatpush.msra.mxu0 0.0
        %526 = vmatpush.msra.mxu0 0.0
        %527 = vmatpush.msra.mxu0 0.0
        %528 = vmatpush.msra.mxu0 0.0
        %529 = vmatpush.msra.mxu0 0.0
        %530 = vmatpush.msra.mxu0 0.0
        %531 = vmatpush.msra.mxu0 0.0
        %532 = vmatpush.msra.mxu0 0.0
        %533 = vmatpush.msra.mxu0 0.0
        %534 = vmatpush.msra.mxu0 0.0
        %535 = vmatpush.msra.mxu0 0.0
        %536 = vmatpush.msra.mxu0 0.0
        %537 = vmatpush.msra.mxu0 0.0
        %v538 = vand.u32 %v458, 4294901760
        %v539 = vsub.f32 %v458, %v538
        %540 = vmatpush.msra.mxu0 %v539
        %v541 = vand.u32 %v456, 4294901760
        %v542 = vsub.f32 %v456, %v541
        %543 = vmatpush.msra.mxu0 %v542
        %v544 = vand.u32 %v464, 4294901760
        %v545 = vsub.f32 %v464, %v544
        %546 = vmatmul.f32.gmra.mxu0 %v545
        %v547 = vpop.f32.mrf.mxu0
        %v548 = vadd.f32 %v522, %v547
        %549 = vdwg.mxu0
        %550 = vmatpush.msra.mxu0 0.0
        %551 = vmatpush.msra.mxu0 0.0
        %552 = vmatpush.msra.mxu0 0.0
        %553 = vmatpush.msra.mxu0 0.0
        %554 = vmatpush.msra.mxu0 0.0
        %555 = vmatpush.msra.mxu0 0.0
        %556 = vmatpush.msra.mxu0 0.0
        %557 = vmatpush.msra.mxu0 0.0
        %558 = vmatpush.msra.mxu0 0.0
        %559 = vmatpush.msra.mxu0 0.0
        %560 = vmatpush.msra.mxu0 0.0
        %561 = vmatpush.msra.mxu0 0.0
        %562 = vmatpush.msra.mxu0 0.0
        %563 = vmatpush.msra.mxu0 0.0
        %v564 = vand.u32 %v458, 4294901760
        %565 = vmatpush.msra.mxu0 %v564
        %v566 = vand.u32 %v456, 4294901760
        %567 = vmatpush.msra.mxu0 %v566
        %v568 = vand.u32 %v464, 4294901760
        %v569 = vsub.f32 %v464, %v568
        %v570 = vand.u32 %v569, 4294901760
        %571 = vmatmul.f32.gmra.mxu0 %v570
        %v572 = vpop.f32.mrf.mxu0
        %v573 = vadd.f32 %v548, %v572
        %574 = vdwg.mxu0
        %575 = vmatpush.msra.mxu0 0.0
        %576 = vmatpush.msra.mxu0 0.0
        %577 = vmatpush.msra.mxu0 0.0
        %578 = vmatpush.msra.mxu0 0.0
        %579 = vmatpush.msra.mxu0 0.0
        %580 = vmatpush.msra.mxu0 0.0
        %581 = vmatpush.msra.mxu0 0.0
        %582 = vmatpush.msra.mxu0 0.0
        %583 = vmatpush.msra.mxu0 0.0
        %584 = vmatpush.msra.mxu0 0.0
        %585 = vmatpush.msra.mxu0 0.0
        %586 = vmatpush.msra.mxu0 0.0
        %587 = vmatpush.msra.mxu0 0.0
        %588 = vmatpush.msra.mxu0 0.0
        %v589 = vand.u32 %v458, 4294901760
        %v590 = vsub.f32 %v458, %v589
        %v591 = vand.u32 %v590, 4294901760
        %592 = vmatpush.msra.mxu0 %v591
        %v593 = vand.u32 %v456, 4294901760
        %v594 = vsub.f32 %v456, %v593
        %v595 = vand.u32 %v594, 4294901760
        %596 = vmatpush.msra.mxu0 %v595
        %v597 = vand.u32 %v464, 4294901760
        %598 = vmatmul.f32.gmra.mxu0 %v597
        %v599 = vpop.f32.mrf.mxu0
        %v600 = vadd.f32 %v573, %v599
        %601 = vdwg.mxu0
        %602 = vmatpush.msra.mxu0 0.0
        %603 = vmatpush.msra.mxu0 0.0
        %604 = vmatpush.msra.mxu0 0.0
        %605 = vmatpush.msra.mxu0 0.0
        %606 = vmatpush.msra.mxu0 0.0
        %607 = vmatpush.msra.mxu0 0.0
        %608 = vmatpush.msra.mxu0 0.0
        %609 = vmatpush.msra.mxu0 0.0
        %610 = vmatpush.msra.mxu0 0.0
        %611 = vmatpush.msra.mxu0 0.0
        %612 = vmatpush.msra.mxu0 0.0
        %613 = vmatpush.msra.mxu0 0.0
        %614 = vmatpush.msra.mxu0 0.0
        %615 = vmatpush.msra.mxu0 0.0
        %v616 = vand.u32 %v458, 4294901760
        %617 = vmatpush.msra.mxu0 %v616
        %v618 = vand.u32 %v456, 4294901760
        %619 = vmatpush.msra.mxu0 %v618
        %v620 = vand.u32 %v464, 4294901760
        %621 = vmatmul.f32.gmra.mxu0 %v620
        %v622 = vpop.f32.mrf.mxu0
        %v623 = vadd.f32 %v600, %v622
        %624 = vdwg.mxu0
        %629 = vrot.lane.b32.xlu0 %v455, 1
        %v630 = vpop.permute.xlu0 %629
        %631 = vrot.lane.b32.xlu0 %v456, 1
        %v632 = vpop.permute.xlu0 %631
        %633 = vrot.lane.b32.xlu0 %v457, 1
        %v634 = vpop.permute.xlu0 %633
        %635 = vrot.lane.b32.xlu0 %v458, 1
        %v636 = vpop.permute.xlu0 %635
        %v637 = vsel %vm452, %v630, %v632
        %v638 = vsel %vm452, %v634, %v636
        %v642 = vsel %vm462, %v459, 0
        %644 = vmatpush.msra.mxu0 0.0
        %645 = vmatpush.msra.mxu0 0.0
        %646 = vmatpush.msra.mxu0 0.0
        %647 = vmatpush.msra.mxu0 0.0
        %648 = vmatpush.msra.mxu0 0.0
        %649 = vmatpush.msra.mxu0 0.0
        %650 = vmatpush.msra.mxu0 0.0
        %651 = vmatpush.msra.mxu0 0.0
        %652 = vmatpush.msra.mxu0 0.0
        %653 = vmatpush.msra.mxu0 0.0
        %654 = vmatpush.msra.mxu0 0.0
        %655 = vmatpush.msra.mxu0 0.0
        %656 = vmatpush.msra.mxu0 0.0
        %657 = vmatpush.msra.mxu0 0.0
        %v658 = vand.u32 %v638, 4294901760
        %659 = vmatpush.msra.mxu0 %v658
        %v660 = vand.u32 %v637, 4294901760
        %661 = vmatpush.msra.mxu0 %v660
        %v662 = vand.u32 %v642, 4294901760
        %v663 = vsub.f32 %v642, %v662
        %v664 = vand.u32 %v663, 4294901760
        %v665 = vsub.f32 %v663, %v664
        %v666 = vand.u32 %v665, 4294901760
        %667 = vmatmul.f32.gmra.mxu0 %v666
        %v668 = vpop.f32.mrf.mxu0
        %v669 = vadd.f32 %v623, %v668
        %670 = vdwg.mxu0
        %671 = vmatpush.msra.mxu0 0.0
        %672 = vmatpush.msra.mxu0 0.0
        %673 = vmatpush.msra.mxu0 0.0
        %674 = vmatpush.msra.mxu0 0.0
        %675 = vmatpush.msra.mxu0 0.0
        %676 = vmatpush.msra.mxu0 0.0
        %677 = vmatpush.msra.mxu0 0.0
        %678 = vmatpush.msra.mxu0 0.0
        %679 = vmatpush.msra.mxu0 0.0
        %680 = vmatpush.msra.mxu0 0.0
        %681 = vmatpush.msra.mxu0 0.0
        %682 = vmatpush.msra.mxu0 0.0
        %683 = vmatpush.msra.mxu0 0.0
        %684 = vmatpush.msra.mxu0 0.0
        %v685 = vand.u32 %v638, 4294901760
        %v686 = vsub.f32 %v638, %v685
        %v687 = vand.u32 %v686, 4294901760
        %v688 = vsub.f32 %v686, %v687
        %v689 = vand.u32 %v688, 4294901760
        %690 = vmatpush.msra.mxu0 %v689
        %v691 = vand.u32 %v637, 4294901760
        %v692 = vsub.f32 %v637, %v691
        %v693 = vand.u32 %v692, 4294901760
        %v694 = vsub.f32 %v692, %v693
        %v695 = vand.u32 %v694, 4294901760
        %696 = vmatpush.msra.mxu0 %v695
        %v697 = vand.u32 %v642, 4294901760
        %698 = vmatmul.f32.gmra.mxu0 %v697
        %v699 = vpop.f32.mrf.mxu0
        %v700 = vadd.f32 %v669, %v699
        %701 = vdwg.mxu0
        %702 = vmatpush.msra.mxu0 0.0
        %703 = vmatpush.msra.mxu0 0.0
        %704 = vmatpush.msra.mxu0 0.0
        %705 = vmatpush.msra.mxu0 0.0
        %706 = vmatpush.msra.mxu0 0.0
        %707 = vmatpush.msra.mxu0 0.0
        %708 = vmatpush.msra.mxu0 0.0
        %709 = vmatpush.msra.mxu0 0.0
        %710 = vmatpush.msra.mxu0 0.0
        %711 = vmatpush.msra.mxu0 0.0
        %712 = vmatpush.msra.mxu0 0.0
        %713 = vmatpush.msra.mxu0 0.0
        %714 = vmatpush.msra.mxu0 0.0
        %715 = vmatpush.msra.mxu0 0.0
        %v716 = vand.u32 %v638, 4294901760
        %v717 = vsub.f32 %v638, %v716
        %718 = vmatpush.msra.mxu0 %v717
        %v719 = vand.u32 %v637, 4294901760
        %v720 = vsub.f32 %v637, %v719
        %721 = vmatpush.msra.mxu0 %v720
        %v722 = vand.u32 %v642, 4294901760
        %v723 = vsub.f32 %v642, %v722
        %724 = vmatmul.f32.gmra.mxu0 %v723
        %v725 = vpop.f32.mrf.mxu0
        %v726 = vadd.f32 %v700, %v725
        %727 = vdwg.mxu0
        %728 = vmatpush.msra.mxu0 0.0
        %729 = vmatpush.msra.mxu0 0.0
        %730 = vmatpush.msra.mxu0 0.0
        %731 = vmatpush.msra.mxu0 0.0
        %732 = vmatpush.msra.mxu0 0.0
        %733 = vmatpush.msra.mxu0 0.0
        %734 = vmatpush.msra.mxu0 0.0
        %735 = vmatpush.msra.mxu0 0.0
        %736 = vmatpush.msra.mxu0 0.0
        %737 = vmatpush.msra.mxu0 0.0
        %738 = vmatpush.msra.mxu0 0.0
        %739 = vmatpush.msra.mxu0 0.0
        %740 = vmatpush.msra.mxu0 0.0
        %741 = vmatpush.msra.mxu0 0.0
        %v742 = vand.u32 %v638, 4294901760
        %743 = vmatpush.msra.mxu0 %v742
        %v744 = vand.u32 %v637, 4294901760
        %745 = vmatpush.msra.mxu0 %v744
        %v746 = vand.u32 %v642, 4294901760
        %v747 = vsub.f32 %v642, %v746
        %v748 = vand.u32 %v747, 4294901760
        %749 = vmatmul.f32.gmra.mxu0 %v748
        %v750 = vpop.f32.mrf.mxu0
        %v751 = vadd.f32 %v726, %v750
        %752 = vdwg.mxu0
        %753 = vmatpush.msra.mxu0 0.0
        %754 = vmatpush.msra.mxu0 0.0
        %755 = vmatpush.msra.mxu0 0.0
        %756 = vmatpush.msra.mxu0 0.0
        %757 = vmatpush.msra.mxu0 0.0
        %758 = vmatpush.msra.mxu0 0.0
        %759 = vmatpush.msra.mxu0 0.0
        %760 = vmatpush.msra.mxu0 0.0
        %761 = vmatpush.msra.mxu0 0.0
        %762 = vmatpush.msra.mxu0 0.0
        %763 = vmatpush.msra.mxu0 0.0
        %764 = vmatpush.msra.mxu0 0.0
        %765 = vmatpush.msra.mxu0 0.0
        %766 = vmatpush.msra.mxu0 0.0
        %v767 = vand.u32 %v638, 4294901760
        %v768 = vsub.f32 %v638, %v767
        %v769 = vand.u32 %v768, 4294901760
        %770 = vmatpush.msra.mxu0 %v769
        %v771 = vand.u32 %v637, 4294901760
        %v772 = vsub.f32 %v637, %v771
        %v773 = vand.u32 %v772, 4294901760
        %774 = vmatpush.msra.mxu0 %v773
        %v775 = vand.u32 %v642, 4294901760
        %776 = vmatmul.f32.gmra.mxu0 %v775
        %v777 = vpop.f32.mrf.mxu0
        %v778 = vadd.f32 %v751, %v777
        %779 = vdwg.mxu0
        %780 = vmatpush.msra.mxu0 0.0
        %781 = vmatpush.msra.mxu0 0.0
        %782 = vmatpush.msra.mxu0 0.0
        %783 = vmatpush.msra.mxu0 0.0
        %784 = vmatpush.msra.mxu0 0.0
        %785 = vmatpush.msra.mxu0 0.0
        %786 = vmatpush.msra.mxu0 0.0
        %787 = vmatpush.msra.mxu0 0.0
        %788 = vmatpush.msra.mxu0 0.0
        %789 = vmatpush.msra.mxu0 0.0
        %790 = vmatpush.msra.mxu0 0.0
        %791 = vmatpush.msra.mxu0 0.0
        %792 = vmatpush.msra.mxu0 0.0
        %793 = vmatpush.msra.mxu0 0.0
        %v794 = vand.u32 %v638, 4294901760
        %795 = vmatpush.msra.mxu0 %v794
        %v796 = vand.u32 %v637, 4294901760
        %797 = vmatpush.msra.mxu0 %v796
        %v798 = vand.u32 %v642, 4294901760
        %799 = vmatmul.f32.gmra.mxu0 %v798
        %v800 = vpop.f32.mrf.mxu0
        %v801 = vadd.f32 %v778, %v800
        %802 = vdwg.mxu0
        %v803 = vld [vmem:[#allocation2 + $0x8] sm:$0xff]
        %v804 = vld [vmem:[#allocation2 + $0x10] sm:$0xff]
        %v805 = vld [vmem:[#allocation2 + $0x20] sm:$0xff]
        %v806 = vld [vmem:[#allocation2 + $0x28] sm:$0xff]
        %s807 = scalar_lea.vmem [#allocation9], 8
        %v808 = vld [vmem:[%s807] sm:$0xf]
        %813 = vrot.lane.b32.xlu0 %v803, 127
        %v814 = vpop.permute.xlu0 %813
        %815 = vrot.lane.b32.xlu0 %v804, 127
        %v816 = vpop.permute.xlu0 %815
        %817 = vrot.lane.b32.xlu0 %v805, 127
        %v818 = vpop.permute.xlu0 %817
        %819 = vrot.lane.b32.xlu0 %v806, 127
        %v820 = vpop.permute.xlu0 %819
        %vm821 = vcmask 1039360
        %v822 = vsel %vm821, %v814, %v816
        %v823 = vsel %vm821, %v818, %v820
        %v827 = vsel %vm462, %v808, 0
        %829 = vmatpush.msra.mxu0 0.0
        %830 = vmatpush.msra.mxu0 0.0
        %831 = vmatpush.msra.mxu0 0.0
        %832 = vmatpush.msra.mxu0 0.0
        %833 = vmatpush.msra.mxu0 0.0
        %834 = vmatpush.msra.mxu0 0.0
        %835 = vmatpush.msra.mxu0 0.0
        %836 = vmatpush.msra.mxu0 0.0
        %837 = vmatpush.msra.mxu0 0.0
        %838 = vmatpush.msra.mxu0 0.0
        %839 = vmatpush.msra.mxu0 0.0
        %840 = vmatpush.msra.mxu0 0.0
        %841 = vmatpush.msra.mxu0 0.0
        %842 = vmatpush.msra.mxu0 0.0
        %v843 = vand.u32 %v823, 4294901760
        %844 = vmatpush.msra.mxu0 %v843
        %v845 = vand.u32 %v822, 4294901760
        %846 = vmatpush.msra.mxu0 %v845
        %v847 = vand.u32 %v827, 4294901760
        %v848 = vsub.f32 %v827, %v847
        %v849 = vand.u32 %v848, 4294901760
        %v850 = vsub.f32 %v848, %v849
        %v851 = vand.u32 %v850, 4294901760
        %852 = vmatmul.f32.gmra.mxu0 %v851
        %v853 = vpop.f32.mrf.mxu0
        %v854 = vadd.f32 0.0, %v853
        %855 = vdwg.mxu0
        %856 = vmatpush.msra.mxu0 0.0
        %857 = vmatpush.msra.mxu0 0.0
        %858 = vmatpush.msra.mxu0 0.0
        %859 = vmatpush.msra.mxu0 0.0
        %860 = vmatpush.msra.mxu0 0.0
        %861 = vmatpush.msra.mxu0 0.0
        %862 = vmatpush.msra.mxu0 0.0
        %863 = vmatpush.msra.mxu0 0.0
        %864 = vmatpush.msra.mxu0 0.0
        %865 = vmatpush.msra.mxu0 0.0
        %866 = vmatpush.msra.mxu0 0.0
        %867 = vmatpush.msra.mxu0 0.0
        %868 = vmatpush.msra.mxu0 0.0
        %869 = vmatpush.msra.mxu0 0.0
        %v870 = vand.u32 %v823, 4294901760
        %v871 = vsub.f32 %v823, %v870
        %v872 = vand.u32 %v871, 4294901760
        %v873 = vsub.f32 %v871, %v872
        %v874 = vand.u32 %v873, 4294901760
        %875 = vmatpush.msra.mxu0 %v874
        %v876 = vand.u32 %v822, 4294901760
        %v877 = vsub.f32 %v822, %v876
        %v878 = vand.u32 %v877, 4294901760
        %v879 = vsub.f32 %v877, %v878
        %v880 = vand.u32 %v879, 4294901760
        %881 = vmatpush.msra.mxu0 %v880
        %v882 = vand.u32 %v827, 4294901760
        %883 = vmatmul.f32.gmra.mxu0 %v882
        %v884 = vpop.f32.mrf.mxu0
        %v885 = vadd.f32 %v854, %v884
        %886 = vdwg.mxu0
        %887 = vmatpush.msra.mxu0 0.0
        %888 = vmatpush.msra.mxu0 0.0
        %889 = vmatpush.msra.mxu0 0.0
        %890 = vmatpush.msra.mxu0 0.0
        %891 = vmatpush.msra.mxu0 0.0
        %892 = vmatpush.msra.mxu0 0.0
        %893 = vmatpush.msra.mxu0 0.0
        %894 = vmatpush.msra.mxu0 0.0
        %895 = vmatpush.msra.mxu0 0.0
        %896 = vmatpush.msra.mxu0 0.0
        %897 = vmatpush.msra.mxu0 0.0
        %898 = vmatpush.msra.mxu0 0.0
        %899 = vmatpush.msra.mxu0 0.0
        %900 = vmatpush.msra.mxu0 0.0
        %v901 = vand.u32 %v823, 4294901760
        %v902 = vsub.f32 %v823, %v901
        %903 = vmatpush.msra.mxu0 %v902
        %v904 = vand.u32 %v822, 4294901760
        %v905 = vsub.f32 %v822, %v904
        %906 = vmatpush.msra.mxu0 %v905
        %v907 = vand.u32 %v827, 4294901760
        %v908 = vsub.f32 %v827, %v907
        %909 = vmatmul.f32.gmra.mxu0 %v908
        %v910 = vpop.f32.mrf.mxu0
        %v911 = vadd.f32 %v885, %v910
        %912 = vdwg.mxu0
        %913 = vmatpush.msra.mxu0 0.0
        %914 = vmatpush.msra.mxu0 0.0
        %915 = vmatpush.msra.mxu0 0.0
        %916 = vmatpush.msra.mxu0 0.0
        %917 = vmatpush.msra.mxu0 0.0
        %918 = vmatpush.msra.mxu0 0.0
        %919 = vmatpush.msra.mxu0 0.0
        %920 = vmatpush.msra.mxu0 0.0
        %921 = vmatpush.msra.mxu0 0.0
        %922 = vmatpush.msra.mxu0 0.0
        %923 = vmatpush.msra.mxu0 0.0
        %924 = vmatpush.msra.mxu0 0.0
        %925 = vmatpush.msra.mxu0 0.0
        %926 = vmatpush.msra.mxu0 0.0
        %v927 = vand.u32 %v823, 4294901760
        %928 = vmatpush.msra.mxu0 %v927
        %v929 = vand.u32 %v822, 4294901760
        %930 = vmatpush.msra.mxu0 %v929
        %v931 = vand.u32 %v827, 4294901760
        %v932 = vsub.f32 %v827, %v931
        %v933 = vand.u32 %v932, 4294901760
        %934 = vmatmul.f32.gmra.mxu0 %v933
        %v935 = vpop.f32.mrf.mxu0
        %v936 = vadd.f32 %v911, %v935
        %937 = vdwg.mxu0
        %938 = vmatpush.msra.mxu0 0.0
        %939 = vmatpush.msra.mxu0 0.0
        %940 = vmatpush.msra.mxu0 0.0
        %941 = vmatpush.msra.mxu0 0.0
        %942 = vmatpush.msra.mxu0 0.0
        %943 = vmatpush.msra.mxu0 0.0
        %944 = vmatpush.msra.mxu0 0.0
        %945 = vmatpush.msra.mxu0 0.0
        %946 = vmatpush.msra.mxu0 0.0
        %947 = vmatpush.msra.mxu0 0.0
        %948 = vmatpush.msra.mxu0 0.0
        %949 = vmatpush.msra.mxu0 0.0
        %950 = vmatpush.msra.mxu0 0.0
        %951 = vmatpush.msra.mxu0 0.0
        %v952 = vand.u32 %v823, 4294901760
        %v953 = vsub.f32 %v823, %v952
        %v954 = vand.u32 %v953, 4294901760
        %955 = vmatpush.msra.mxu0 %v954
        %v956 = vand.u32 %v822, 4294901760
        %v957 = vsub.f32 %v822, %v956
        %v958 = vand.u32 %v957, 4294901760
        %959 = vmatpush.msra.mxu0 %v958
        %v960 = vand.u32 %v827, 4294901760
        %961 = vmatmul.f32.gmra.mxu0 %v960
        %v962 = vpop.f32.mrf.mxu0
        %v963 = vadd.f32 %v936, %v962
        %964 = vdwg.mxu0
        %965 = vmatpush.msra.mxu0 0.0
        %966 = vmatpush.msra.mxu0 0.0
        %967 = vmatpush.msra.mxu0 0.0
        %968 = vmatpush.msra.mxu0 0.0
        %969 = vmatpush.msra.mxu0 0.0
        %970 = vmatpush.msra.mxu0 0.0
        %971 = vmatpush.msra.mxu0 0.0
        %972 = vmatpush.msra.mxu0 0.0
        %973 = vmatpush.msra.mxu0 0.0
        %974 = vmatpush.msra.mxu0 0.0
        %975 = vmatpush.msra.mxu0 0.0
        %976 = vmatpush.msra.mxu0 0.0
        %977 = vmatpush.msra.mxu0 0.0
        %978 = vmatpush.msra.mxu0 0.0
        %v979 = vand.u32 %v823, 4294901760
        %980 = vmatpush.msra.mxu0 %v979
        %v981 = vand.u32 %v822, 4294901760
        %982 = vmatpush.msra.mxu0 %v981
        %v983 = vand.u32 %v827, 4294901760
        %984 = vmatmul.f32.gmra.mxu0 %v983
        %v985 = vpop.f32.mrf.mxu0
        %v986 = vadd.f32 %v963, %v985
        %987 = vdwg.mxu0
        %v988 = vadd.f32 %v801, %v986
        %v989 = vld [vmem:[%s4] sm:$0xf]
        %991 = vset.pattern.permute.xlu0 0
        %992 = vperm.xlu0 %991, %v989
        %v993 = vpop.permute.xlu0 %992
        %v995 = vadd.f32 %v988, %v993
        %996 = vst [vmem:[%s416] sm:$0xf] %v995
        %v997 = vlaneseq
        %v998 = vand.u32 %v997, 127
        %s999 = smul.u32 %s36, 128
        %v1000 = vstv %s999
        %v1001 = vadd.s32 %v998, %v1000
        %vm1002 = vcmp.lt.s32.totalorder %v1001, 300
        %v1003 = vsel %vm1002, 1, 0
        %v1004 = vcvt.s32.f32 %v1003
        %v1005 = vmul.f32 %v995, %v1004
        %vm1006 = vcmask 1043456
        %v1007 = vsel %vm1006, %v1005, 0.0
        %1008 = vadd.xlane.f32.xlu0 %v1007
        %v1009 = vpop.xlane.xlu0 %1008
        %v1010 = vrot.slane %v1009, 4
        %v1011 = vadd.f32 %v1009, %v1010
        %v1012 = vrot.slane %v1011, 2
        %v1013 = vadd.f32 %v1011, %v1012
        %v1014 = vrot.slane %v1013, 1
        %v1015 = vadd.f32 %v1013, %v1014
        %s1016 = vtos %v1015
        %v1017 = vmul.f32 %v1005, %v1005
        %v1018 = vsel %vm1006, %v1017, 0.0
        %1019 = vadd.xlane.f32.xlu0 %v1018
        %v1020 = vpop.xlane.xlu0 %1019
        %v1021 = vrot.slane %v1020, 4
        %v1022 = vadd.f32 %v1020, %v1021
        %v1023 = vrot.slane %v1022, 2
        %v1024 = vadd.f32 %v1022, %v1023
        %v1025 = vrot.slane %v1024, 1
        %v1026 = vadd.f32 %v1024, %v1025
        %s1027 = vtos %v1026
        %vm1028 = vcmp.eq.s32.totalorder %v998, 0
        %v1029 = vstv %s1016
        %v1030 = vsel %vm1028, %v1029, 0.0
        %vm1031 = vcmp.eq.s32.totalorder %v998, 1
        %v1032 = vstv %s1027
        %v1033 = vsel %vm1031, %v1032, 0.0
        %v1034 = vadd.f32 %v1030, %v1033
        %1035 = vst [vmem:[%s422] sm:$0x1] %v1034
        %s1036 = sand.u32 %s191, 1
        %s1037 = scalar_lea.sflag [#allocation5], %s1036
        %s1038 = sand.u32 %s191, 1
        %s1039 = smul.addr %s1038, 4
        %s1040 = scalar_lea.vmem [#allocation11], %s1039
        %s1041 = sand.u32 %s219, 1
        %s1042 = scalar_lea.sflag [#allocation13], %s1041
        %s1043 = sand.u32 %s219, 1
        %s1044 = scalar_lea.vmem [#allocation12], %s1043
        // Predicated region
        $region57: #{tpu_custom_call.1} parent=39 // pred_check
          %p1045 = pneg %p201
        $region58: #{tpu_custom_call.1} parent=39 // pred_check_branch
          %1047 = sbr.rel (%p1045) target = $region60
        $region59: #{tpu_custom_call.1} parent=39 // pred_region
          %1049 = vsyncadd %s1037, 0
          %s1050 = smul.addr %s35, 3
          %s1051 = sadd.s32 %s36, %s1050
          %s1052 = smul.addr %s1051, 4
          %s1053 = scalar_lea.hbm %s5, %s1052
          %s1055 = sshll.u32 %s1040, 4
          %s1056 = int_to_ptr.vmem [resolvable:$true] %s1055
          %s1057 = sshll.u32 %s1053, 4
          %s1058 = int_to_ptr.hbm [resolvable:$true] %s1057
          %1060 = dma.vmem_to_hbm [thread:$0]  %s1056, 64, %s1058, %s1037
        $region60: #{tpu_custom_call.1} parent=39 // pred_fallthru
          _
        // Predicated region
        $region61: #{tpu_custom_call.1} parent=39 // pred_check
          %p1061 = pneg %p229
        $region62: #{tpu_custom_call.1} parent=39 // pred_check_branch
          %1063 = sbr.rel (%p1061) target = $region64
        $region63: #{tpu_custom_call.1} parent=39 // pred_region
          %1065 = vsyncadd %s1042, 0
          %s1066 = smul.addr %s35, 3
          %s1067 = sadd.s32 %s36, %s1066
          %s1068 = scalar_lea.hbm %s6, %s1067
          %s1070 = sshll.u32 %s1044, 4
          %s1071 = int_to_ptr.vmem [resolvable:$true] %s1070
          %s1072 = sshll.u32 %s1068, 4
          %s1073 = int_to_ptr.hbm [resolvable:$true] %s1072
          %1075 = dma.vmem_to_hbm [thread:$0]  %s1071, 16, %s1073, %s1042
        $region64: #{tpu_custom_call.1} parent=39 // pred_fallthru
          _
      $region40: #{tpu_custom_call.1} parent=5 // pred_fallthru
        _
      %p1076 = scmp.le.s32.totalorder 2, %s26
      // Predicated region
      $region65: #{tpu_custom_call.1} parent=5 // pred_check
        %p1077 = pneg %p1076
      $region66: #{tpu_custom_call.1} parent=5 // pred_check_branch
        %1079 = sbr.rel (%p1077) target = $region68
      $region67: #{tpu_custom_call.1} parent=5 // pred_region
        %s1080 = ssub.s32 %s26, 2
        // Predicated region
        $region69: #{tpu_custom_call.1} parent=67 // pred_check
          %p1081 = pneg %p207
        $region70: #{tpu_custom_call.1} parent=67 // pred_check_branch
          %1083 = sbr.rel (%p1081) target = $region72
        $region71: #{tpu_custom_call.1} parent=67 // pred_region
          %s1084 = sand.u32 %s192, 1
          %s1085 = scalar_lea.sflag [#allocation5], %s1084
          %s1086 = sand.u32 %s192, 1
          %s1087 = smul.addr %s1086, 4
          %s1088 = scalar_lea.vmem [#allocation11], %s1087
          %1090 = dma.done %s1085, 64
        $region72: #{tpu_custom_call.1} parent=67 // pred_fallthru
          _
        // Predicated region
        $region73: #{tpu_custom_call.1} parent=67 // pred_check
          %p1091 = pneg %p235
        $region74: #{tpu_custom_call.1} parent=67 // pred_check_branch
          %1093 = sbr.rel (%p1091) target = $region76
        $region75: #{tpu_custom_call.1} parent=67 // pred_region
          %s1094 = sand.u32 %s220, 1
          %s1095 = scalar_lea.sflag [#allocation13], %s1094
          %s1096 = sand.u32 %s220, 1
          %s1097 = scalar_lea.vmem [#allocation12], %s1096
          %1099 = dma.done %s1095, 16
        $region76: #{tpu_custom_call.1} parent=67 // pred_fallthru
          _
      $region68: #{tpu_custom_call.1} parent=5 // pred_fallthru
        _
    $region6: #{tpu_custom_call.1} parent=1 // loop_footer
      %s30 = sadd.s32 1, %s26
    $region7: #{tpu_custom_call.1} parent=1 // loop_footer_branch
      %25 = sbr.rel target = $region3
    $region8: #{tpu_custom_call.1} parent=1 // loop_exit
      _
    %1100 = vsyncpa [#allocation4], 1
    %s1101 = scalar_lea.sflag [#allocation4], 1
    %1102 = vsyncpa %s1101, 1
    %1103 = vsyncpa [#allocation7], 1
    %s1104 = scalar_lea.sflag [#allocation7], 1
    %1105 = vsyncpa %s1104, 1
    %1106 = vsyncpa [#allocation10], 1
    %1107 = vsyncpa [#allocation5], 1
    %s1108 = scalar_lea.sflag [#allocation5], 1
    %1109 = vsyncpa %s1108, 1
    %1110 = vsyncpa [#allocation13], 1
    %s1111 = scalar_lea.sflag [#allocation13], 1
    %1112 = vsyncpa %s1111, 1

</llo_original>
